<compile_context>
chip_gen: v5e
topology: v5e:2x2
jax: 0.10.0
libtpu: 0.0.40
codegen_flags: <defaults>
</compile_context>

<pallas_src>
import functools

import jax
import jax.numpy as jnp
from jax.experimental import pallas as pl
from jax.experimental.pallas import tpu as pltpu


# ----------------------------------------------------------------------------
# Kernel: 4 MXU matmuls + elementwise, everything VMEM-resident, one grid step.
# ----------------------------------------------------------------------------
def _ensemble_kernel(x_ref, w1_ref, b1_ref, w2_ref, b2_ref, whd_ref, bhd_ref, k_ref,
                     mean_ref, sigma_ref, *, num_learners, out_dim):
    L, O = num_learners, out_dim

    x = x_ref[...]                                              # (B, Din) f32

    # Fused MLP: one lane-dense matmul per layer for ALL learners.
    h = jnp.maximum(
        jnp.dot(x, w1_ref[...], preferred_element_type=jnp.float32) + b1_ref[...], 0.0)
    h = jnp.maximum(
        jnp.dot(h, w2_ref[...], preferred_element_type=jnp.float32) + b2_ref[...], 0.0)

    # Fused heads: columns [mu_0..mu_{L-1} | logsig_0..logsig_{L-1} | ensemble_mean].
    z = jnp.dot(h, whd_ref[...], preferred_element_type=jnp.float32) + bhd_ref[...]
    mu_all = z[:, :L * O]                                       # (B, L*O)
    sig_all = jnp.exp(z[:, L * O:2 * L * O])                    # (B, L*O), single EUP exp
    mean = z[:, 2 * L * O:]                                     # (B, O), straight from MXU

    # sum_l(sigma_l^2 + mu_l^2) via a constant 0/1 matmul on the (idle) MXU.
    sq_all = sig_all * sig_all + mu_all * mu_all
    sum_sq = jnp.dot(sq_all, k_ref[...], preferred_element_type=jnp.float32)   # (B, O)

    var = jnp.maximum(sum_sq * jnp.float32(1.0 / L) - mean * mean, 0.0)  # clamp fp cancel
    mean_ref[...] = mean
    sigma_ref[...] = jnp.sqrt(var)


# ----------------------------------------------------------------------------
# One-time weight fusion (NOT on the hot path).
# ----------------------------------------------------------------------------
def _block_diag(blocks):
    """blocks: (L, Rin, Rout) -> block-diagonal (L*Rin, L*Rout). No O(L^2) intermediate."""
    L, Rin, Rout = blocks.shape
    out = jnp.zeros((L * Rin, L * Rout), blocks.dtype)
    for l in range(L):
        out = out.at[l * Rin:(l + 1) * Rin, l * Rout:(l + 1) * Rout].set(blocks[l])
    return out


def fuse_params(params):
    """Build fused lane-dense operands ONCE (call when params are created/updated)."""
    L, Din, H = params["w1"].shape
    O = params["wmu"].shape[-1]

    w1c = jnp.transpose(params["w1"], (1, 0, 2)).reshape(Din, L * H)       # (Din, L*H)
    b1c = params["b1"].reshape(1, L * H)
    w2bd = _block_diag(params["w2"])                                       # (L*H, L*H)
    b2c = params["b2"].reshape(1, L * H)

    # Head weight slab: [blockdiag(Wmu) | blockdiag(Wsig) | vstack(Wmu)/L]  -> (L*H, 2*L*O + O)
    wmean = params["wmu"].reshape(L * H, O) / jnp.float32(L)
    whd = jnp.concatenate(
        [_block_diag(params["wmu"]), _block_diag(params["wsg"]), wmean], axis=1)
    bmean = params["bmu"].reshape(L, O).mean(axis=0, keepdims=True)
    bhd = jnp.concatenate(
        [params["bmu"].reshape(1, L * O), params["bsg"].reshape(1, L * O), bmean], axis=1)

    # Constant 0/1 reduction matrix summing per-learner blocks: (L*O, O).
    k_red = jnp.tile(jnp.eye(O, dtype=jnp.float32), (L, 1))

    return (w1c, b1c, w2bd, b2c, whd, bhd, k_red)


# ----------------------------------------------------------------------------
# Jitted forward: exactly one pallas_call per invocation.
# ----------------------------------------------------------------------------
@jax.jit
def ensemble_forward(x, fused):
    """x: (B, D_in) f32. fused: output of fuse_params. Returns (mean, sigma), each (B, O)."""
    w1c, b1c, w2bd, b2c, whd, bhd, k_red = fused
    B, Din = x.shape
    O = k_red.shape[1]
    L = k_red.shape[0] // O
    LH = w2bd.shape[0]

    flops = 2 * B * (Din * LH + LH * LH + LH * whd.shape[1] + L * O * O)
    bytes_accessed = 4 * (x.size + w1c.size + b1c.size + w2bd.size + b2c.size
                          + whd.size + bhd.size + k_red.size + 2 * B * O)

    kernel = functools.partial(_ensemble_kernel, num_learners=L, out_dim=O)
    vmem = pl.BlockSpec(memory_space=pltpu.MemorySpace.VMEM)

    mean, sigma = pl.pallas_call(
        kernel,
        out_shape=(jax.ShapeDtypeStruct((B, O), jnp.float32),
                   jax.ShapeDtypeStruct((B, O), jnp.float32)),
        in_specs=[vmem] * 8,
        out_specs=(vmem, vmem),
        cost_estimate=pl.CostEstimate(flops=flops,
                                      transcendentals=B * L * O,
                                      bytes_accessed=bytes_accessed),
    )(x, w1c, b1c, w2bd, b2c, whd, bhd, k_red)

    return mean, sigma


# ----------------------------------------------------------------------------
# Params + pure-JAX reference (for the self-test)
# ----------------------------------------------------------------------------
def init_params(key, num_learners, d_in, hidden, d_out):
    """Deterministic PyTorch-style (uniform +/- 1/sqrt(fan_in)) init, stacked over learners."""
    def uni(k, shape, fan_in):
        bound = 1.0 / jnp.sqrt(jnp.float32(fan_in))
        return jax.random.uniform(k, shape, jnp.float32, -bound, bound)

    ks = jax.random.split(key, 8)
    L = num_learners
    return {
        "w1":  uni(ks[0], (L, d_in, hidden), d_in),
        "b1":  uni(ks[1], (L, 1, hidden), d_in),
        "w2":  uni(ks[2], (L, hidden, hidden), hidden),
        "b2":  uni(ks[3], (L, 1, hidden), hidden),
        "wmu": uni(ks[4], (L, hidden, d_out), hidden),
        "bmu": uni(ks[5], (L, 1, d_out), hidden),
        "wsg": uni(ks[6], (L, hidden, d_out), hidden),
        "bsg": uni(ks[7], (L, 1, d_out), hidden),
    }


def reference_forward(x, params):
    """Pure-JAX reference mirroring the PyTorch ensemble forward."""
    mus, sigmas = [], []
    L = params["w1"].shape[0]
    for l in range(L):
        h = jnp.maximum(x @ params["w1"][l] + params["b1"][l], 0.0)
        h = jnp.maximum(h @ params["w2"][l] + params["b2"][l], 0.0)
        mu = h @ params["wmu"][l] + params["bmu"][l]
        sigma = jnp.exp(h @ params["wsg"][l] + params["bsg"][l])
        mus.append(mu)
        sigmas.append(sigma)
    mus = jnp.stack(mus, axis=-1)      # (B, O, L)  (G=1 squeezed)
    sigmas = jnp.stack(sigmas, axis=-1)
    mean = mus.mean(-1)
    var = (sigmas ** 2 + mus ** 2).mean(-1) - mean ** 2
    return mean, jnp.sqrt(jnp.maximum(var, 0.0))


if __name__ == "__main__":
    NUM_LEARNERS = 4
    B, D_IN, HIDDEN, D_OUT = 8, 8, 32, 4   # mdn_config: num_gaussians=1, out_dim=D_OUT

    key = jax.random.PRNGKey(0)
    kx, kp = jax.random.split(key)
    x = jax.random.normal(kx, (B, D_IN), jnp.float32)
    params = init_params(kp, NUM_LEARNERS, D_IN, HIDDEN, D_OUT)

    # Fuse the per-learner weights ONCE (hoisted off the per-call path).
    fused = jax.block_until_ready(fuse_params(params))

    mean, sigma = ensemble_forward(x, fused)
    jax.block_until_ready((mean, sigma))

    ref_mean, ref_sigma = reference_forward(x, params)
    assert jnp.allclose(mean, ref_mean, atol=1e-4, rtol=1e-4)
    assert jnp.allclose(sigma, ref_sigma, atol=1e-4, rtol=1e-4)

    print("KERNEL_OK")
</pallas_src>

<mosaic_0001>
module attributes {stable_mosaic.version = 11 : i64} {
  func.func @_ensemble_kernel(%arg0: memref<8x8xf32, #tpu.memory_space<vmem>>, %arg1: memref<8x128xf32, #tpu.memory_space<vmem>>, %arg2: memref<1x128xf32, #tpu.memory_space<vmem>>, %arg3: memref<128x128xf32, #tpu.memory_space<vmem>>, %arg4: memref<1x128xf32, #tpu.memory_space<vmem>>, %arg5: memref<128x36xf32, #tpu.memory_space<vmem>>, %arg6: memref<1x36xf32, #tpu.memory_space<vmem>>, %arg7: memref<16x4xf32, #tpu.memory_space<vmem>>, %arg8: memref<8x4xf32, #tpu.memory_space<vmem>>, %arg9: memref<8x4xf32, #tpu.memory_space<vmem>>) attributes {dimension_semantics = [], scalar_prefetch = 0 : i64, scratch_operands = 0 : i64, tpu.core_type = #tpu.core_type<tc>} {
    %c0 = arith.constant 0 : index
    %c0_0 = arith.constant 0 : index
    %0 = vector.load %arg0[%c0, %c0_0] : memref<8x8xf32, #tpu.memory_space<vmem>>, vector<8x8xf32>
    %c0_1 = arith.constant 0 : index
    %c0_2 = arith.constant 0 : index
    %1 = vector.load %arg1[%c0_1, %c0_2] : memref<8x128xf32, #tpu.memory_space<vmem>>, vector<8x128xf32>
    %cst = arith.constant dense<0.000000e+00> : vector<8x128xf32>
    %2 = tpu.matmul %0, %1, %cst {dimension_numbers = #tpu.dot_dimension_numbers<[1], [0], [0], [1], [0, 0, 1, 1], [], []>} : vector<8x8xf32>, vector<8x128xf32>, vector<8x128xf32> -> vector<8x128xf32>
    %c0_3 = arith.constant 0 : index
    %c0_4 = arith.constant 0 : index
    %3 = vector.load %arg2[%c0_3, %c0_4] : memref<1x128xf32, #tpu.memory_space<vmem>>, vector<1x128xf32>
    %4 = vector.broadcast %3 : vector<1x128xf32> to vector<8x128xf32>
    %5 = arith.addf %2, %4 : vector<8x128xf32>
    %cst_5 = arith.constant 0.000000e+00 : f32
    %6 = vector.broadcast %cst_5 : f32 to vector<8x128xf32>
    %7 = arith.maximumf %5, %6 : vector<8x128xf32>
    %c0_6 = arith.constant 0 : index
    %c0_7 = arith.constant 0 : index
    %8 = vector.load %arg3[%c0_6, %c0_7] : memref<128x128xf32, #tpu.memory_space<vmem>>, vector<128x128xf32>
    %cst_8 = arith.constant dense<0.000000e+00> : vector<8x128xf32>
    %9 = tpu.matmul %7, %8, %cst_8 {dimension_numbers = #tpu.dot_dimension_numbers<[1], [0], [0], [1], [0, 0, 1, 1], [], []>} : vector<8x128xf32>, vector<128x128xf32>, vector<8x128xf32> -> vector<8x128xf32>
    %c0_9 = arith.constant 0 : index
    %c0_10 = arith.constant 0 : index
    %10 = vector.load %arg4[%c0_9, %c0_10] : memref<1x128xf32, #tpu.memory_space<vmem>>, vector<1x128xf32>
    %11 = vector.broadcast %10 : vector<1x128xf32> to vector<8x128xf32>
    %12 = arith.addf %9, %11 : vector<8x128xf32>
    %cst_11 = arith.constant 0.000000e+00 : f32
    %13 = vector.broadcast %cst_11 : f32 to vector<8x128xf32>
    %14 = arith.maximumf %12, %13 : vector<8x128xf32>
    %c0_12 = arith.constant 0 : index
    %c0_13 = arith.constant 0 : index
    %15 = vector.load %arg5[%c0_12, %c0_13] : memref<128x36xf32, #tpu.memory_space<vmem>>, vector<128x36xf32>
    %cst_14 = arith.constant dense<0.000000e+00> : vector<8x36xf32>
    %16 = tpu.matmul %14, %15, %cst_14 {dimension_numbers = #tpu.dot_dimension_numbers<[1], [0], [0], [1], [0, 0, 1, 1], [], []>} : vector<8x128xf32>, vector<128x36xf32>, vector<8x36xf32> -> vector<8x36xf32>
    %c0_15 = arith.constant 0 : index
    %c0_16 = arith.constant 0 : index
    %17 = vector.load %arg6[%c0_15, %c0_16] : memref<1x36xf32, #tpu.memory_space<vmem>>, vector<1x36xf32>
    %18 = vector.broadcast %17 : vector<1x36xf32> to vector<8x36xf32>
    %19 = arith.addf %16, %18 : vector<8x36xf32>
    %20 = vector.extract_strided_slice %19 {offsets = [0, 0], sizes = [8, 16], strides = [1, 1]} : vector<8x36xf32> to vector<8x16xf32>
    %21 = vector.extract_strided_slice %19 {offsets = [0, 16], sizes = [8, 16], strides = [1, 1]} : vector<8x36xf32> to vector<8x16xf32>
    %22 = math.exp %21 : vector<8x16xf32>
    %23 = vector.extract_strided_slice %19 {offsets = [0, 32], sizes = [8, 4], strides = [1, 1]} : vector<8x36xf32> to vector<8x4xf32>
    %24 = arith.mulf %22, %22 : vector<8x16xf32>
    %25 = arith.mulf %20, %20 : vector<8x16xf32>
    %26 = arith.addf %24, %25 : vector<8x16xf32>
    %c0_17 = arith.constant 0 : index
    %c0_18 = arith.constant 0 : index
    %27 = vector.load %arg7[%c0_17, %c0_18] : memref<16x4xf32, #tpu.memory_space<vmem>>, vector<16x4xf32>
    %cst_19 = arith.constant dense<0.000000e+00> : vector<8x4xf32>
    %28 = tpu.matmul %26, %27, %cst_19 {dimension_numbers = #tpu.dot_dimension_numbers<[1], [0], [0], [1], [0, 0, 1, 1], [], []>} : vector<8x16xf32>, vector<16x4xf32>, vector<8x4xf32> -> vector<8x4xf32>
    %cst_20 = arith.constant 2.500000e-01 : f32
    %29 = vector.broadcast %cst_20 : f32 to vector<8x4xf32>
    %30 = arith.mulf %28, %29 : vector<8x4xf32>
    %31 = arith.mulf %23, %23 : vector<8x4xf32>
    %32 = arith.subf %30, %31 : vector<8x4xf32>
    %cst_21 = arith.constant 0.000000e+00 : f32
    %33 = vector.broadcast %cst_21 : f32 to vector<8x4xf32>
    %34 = arith.maximumf %32, %33 : vector<8x4xf32>
    %c0_22 = arith.constant 0 : index
    %c0_23 = arith.constant 0 : index
    %35 = vector.load %arg8[%c0_22, %c0_23] : memref<8x4xf32, #tpu.memory_space<vmem>>, vector<8x4xf32>
    tpu.vector_store %arg8[%c0_22, %c0_23], %23 {strides = array<i32>} : memref<8x4xf32, #tpu.memory_space<vmem>>, vector<8x4xf32>,
    %36 = math.sqrt %34 : vector<8x4xf32>
    %c0_24 = arith.constant 0 : index
    %c0_25 = arith.constant 0 : index
    %37 = vector.load %arg9[%c0_24, %c0_25] : memref<8x4xf32, #tpu.memory_space<vmem>>, vector<8x4xf32>
    tpu.vector_store %arg9[%c0_24, %c0_25], %36 {strides = array<i32>} : memref<8x4xf32, #tpu.memory_space<vmem>>, vector<8x4xf32>,
    return
  }
}

</mosaic_0001>

<llo_original>
// kernel: ensemble_forward.1
$region0: #{ensemble_forward.1}
  #allocation0 [shape = 'u32[]', space=smem, size = 0x4, offset = 0x4, fixed_abs, tag = 'smem constant byte address 0x4 - core index']
  #allocation1 [shape = 'u32[72,128]{1,0:T(1,128)}', space=vmem, size = 0x9000, scoped, tag = 'internal scratch']
  %s0 = inlined_call_operand.vmem [shape: f32[8,8], index: 0, kind: input, shape index: {}]
  %s1 = inlined_call_operand.vmem [shape: f32[8,128], index: 1, kind: input, shape index: {}]
  %s2 = inlined_call_operand.vmem [shape: f32[1,128], index: 2, kind: input, shape index: {}]
  %s3 = inlined_call_operand.vmem [shape: f32[128,128], index: 3, kind: input, shape index: {}]
  %s4 = inlined_call_operand.vmem [shape: f32[1,128], index: 4, kind: input, shape index: {}]
  %s5 = inlined_call_operand.vmem [shape: f32[128,36], index: 5, kind: input, shape index: {}]
  %s6 = inlined_call_operand.vmem [shape: f32[1,36], index: 6, kind: input, shape index: {}]
  %s7 = inlined_call_operand.vmem [shape: f32[16,4], index: 7, kind: input, shape index: {}]
  %s8 = inlined_call_operand.vmem [shape: f32[8,4], index: 8, kind: output, shape index: {0}]
  %s9 = inlined_call_operand.vmem [shape: f32[8,4], index: 9, kind: output, shape index: {1}]
  %10 = xla_tuple %s8, %s9
  %s11 = sld [smem:[#allocation0]]
  $region50: #{ensemble_forward.1} parent=0
    _
  %s13 = ssub.s32 1, %s11
  %s14 = scalar_select 0, %s13, %s11
  // Predicated region
  $region2: #{ensemble_forward.1} parent=0 // pred_check
    _
  $region3: #{ensemble_forward.1} parent=0 // pred_check_branch
    %16 = sbr.rel (0) target = $region5
  $region4: #{ensemble_forward.1} parent=0 // pred_region
    _
  $region5: #{ensemble_forward.1} parent=0 // pred_fallthru
    _
  // Predicated region
  $region6: #{ensemble_forward.1} parent=0 // pred_check
    _
  $region7: #{ensemble_forward.1} parent=0 // pred_check_branch
    %18 = sbr.rel (0) target = $region9
  $region8: #{ensemble_forward.1} parent=0 // pred_region
    _
  $region9: #{ensemble_forward.1} parent=0 // pred_fallthru
    _
  // Predicated region
  $region10: #{ensemble_forward.1} parent=0 // pred_check
    _
  $region11: #{ensemble_forward.1} parent=0 // pred_check_branch
    %20 = sbr.rel (0) target = $region13
  $region12: #{ensemble_forward.1} parent=0 // pred_region
    _
  $region13: #{ensemble_forward.1} parent=0 // pred_fallthru
    _
  // Predicated region
  $region14: #{ensemble_forward.1} parent=0 // pred_check
    _
  $region15: #{ensemble_forward.1} parent=0 // pred_check_branch
    %22 = sbr.rel (0) target = $region17
  $region16: #{ensemble_forward.1} parent=0 // pred_region
    _
  $region17: #{ensemble_forward.1} parent=0 // pred_fallthru
    _
  // Predicated region
  $region18: #{ensemble_forward.1} parent=0 // pred_check
    _
  $region19: #{ensemble_forward.1} parent=0 // pred_check_branch
    %24 = sbr.rel (0) target = $region21
  $region20: #{ensemble_forward.1} parent=0 // pred_region
    _
  $region21: #{ensemble_forward.1} parent=0 // pred_fallthru
    _
  // Predicated region
  $region22: #{ensemble_forward.1} parent=0 // pred_check
    _
  $region23: #{ensemble_forward.1} parent=0 // pred_check_branch
    %26 = sbr.rel (0) target = $region25
  $region24: #{ensemble_forward.1} parent=0 // pred_region
    _
  $region25: #{ensemble_forward.1} parent=0 // pred_fallthru
    _
  // Predicated region
  $region26: #{ensemble_forward.1} parent=0 // pred_check
    _
  $region27: #{ensemble_forward.1} parent=0 // pred_check_branch
    %28 = sbr.rel (0) target = $region29
  $region28: #{ensemble_forward.1} parent=0 // pred_region
    _
  $region29: #{ensemble_forward.1} parent=0 // pred_fallthru
    _
  // Predicated region
  $region30: #{ensemble_forward.1} parent=0 // pred_check
    _
  $region31: #{ensemble_forward.1} parent=0 // pred_check_branch
    %30 = sbr.rel (0) target = $region33
  $region32: #{ensemble_forward.1} parent=0 // pred_region
    _
  $region33: #{ensemble_forward.1} parent=0 // pred_fallthru
    _
  %v31 = vld [vmem:[%s0] sm:$0xff]
  %v32 = vld [vmem:[%s1] sm:$0xff]
  %v33 = vld [vmem:[%s2] sm:$0x1]
  %v35 = vperm.slane %v33, 0
  %vm37 = vcmask 64512
  %v39 = vsel %vm37, %v31, 0
  %41 = vmatpush.msra.mxu0 0.0
  %42 = vmatpush.msra.mxu0 0.0
  %43 = vmatpush.msra.mxu0 0.0
  %44 = vmatpush.msra.mxu0 0.0
  %45 = vmatpush.msra.mxu0 0.0
  %46 = vmatpush.msra.mxu0 0.0
  %47 = vmatpush.msra.mxu0 0.0
  %48 = vmatpush.msra.mxu0 0.0
  %49 = vmatpush.msra.mxu0 0.0
  %50 = vmatpush.msra.mxu0 0.0
  %51 = vmatpush.msra.mxu0 0.0
  %52 = vmatpush.msra.mxu0 0.0
  %53 = vmatpush.msra.mxu0 0.0
  %54 = vmatpush.msra.mxu0 0.0
  %55 = vmatpush.msra.mxu0 0.0
  %56 = vmatpush.msra.mxu0 %v32
  %57 = vmatmul.f32.gmra.mxu0 %v39
  %v58 = vpop.f32.mrf.mxu0
  %v59 = vadd.f32 %v35, %v58
  %60 = vdwg.mxu0
  %v61 = vmax.f32 %v59, 0.0
  %v62 = vld [vmem:[%s3] sm:$0xff]
  %v63 = vld [vmem:[%s3 + $0x8] sm:$0xff]
  %v64 = vld [vmem:[%s3 + $0x10] sm:$0xff]
  %v65 = vld [vmem:[%s3 + $0x18] sm:$0xff]
  %v66 = vld [vmem:[%s3 + $0x20] sm:$0xff]
  %v67 = vld [vmem:[%s3 + $0x28] sm:$0xff]
  %v68 = vld [vmem:[%s3 + $0x30] sm:$0xff]
  %v69 = vld [vmem:[%s3 + $0x38] sm:$0xff]
  %v70 = vld [vmem:[%s3 + $0x40] sm:$0xff]
  %v71 = vld [vmem:[%s3 + $0x48] sm:$0xff]
  %v72 = vld [vmem:[%s3 + $0x50] sm:$0xff]
  %v73 = vld [vmem:[%s3 + $0x58] sm:$0xff]
  %v74 = vld [vmem:[%s3 + $0x60] sm:$0xff]
  %v75 = vld [vmem:[%s3 + $0x68] sm:$0xff]
  %v76 = vld [vmem:[%s3 + $0x70] sm:$0xff]
  %v77 = vld [vmem:[%s3 + $0x78] sm:$0xff]
  %v78 = vld [vmem:[%s4] sm:$0x1]
  %v80 = vperm.slane %v78, 0
  %82 = vmatpush.msra.mxu0 %v77
  %83 = vmatpush.msra.mxu0 %v76
  %84 = vmatpush.msra.mxu0 %v75
  %85 = vmatpush.msra.mxu0 %v74
  %86 = vmatpush.msra.mxu0 %v73
  %87 = vmatpush.msra.mxu0 %v72
  %88 = vmatpush.msra.mxu0 %v71
  %89 = vmatpush.msra.mxu0 %v70
  %90 = vmatpush.msra.mxu0 %v69
  %91 = vmatpush.msra.mxu0 %v68
  %92 = vmatpush.msra.mxu0 %v67
  %93 = vmatpush.msra.mxu0 %v66
  %94 = vmatpush.msra.mxu0 %v65
  %95 = vmatpush.msra.mxu0 %v64
  %96 = vmatpush.msra.mxu0 %v63
  %97 = vmatpush.msra.mxu0 %v62
  %98 = vmatmul.f32.gmra.mxu0 %v61
  %v99 = vpop.f32.mrf.mxu0
  %v100 = vadd.f32 %v80, %v99
  %101 = vdwg.mxu0
  %v102 = vmax.f32 %v100, 0.0
  %v103 = vld [vmem:[%s5] sm:$0xff]
  %v104 = vld [vmem:[%s5 + $0x8] sm:$0xff]
  %v105 = vld [vmem:[%s5 + $0x10] sm:$0xff]
  %v106 = vld [vmem:[%s5 + $0x18] sm:$0xff]
  %v107 = vld [vmem:[%s5 + $0x20] sm:$0xff]
  %v108 = vld [vmem:[%s5 + $0x28] sm:$0xff]
  %v109 = vld [vmem:[%s5 + $0x30] sm:$0xff]
  %v110 = vld [vmem:[%s5 + $0x38] sm:$0xff]
  %v111 = vld [vmem:[%s5 + $0x40] sm:$0xff]
  %v112 = vld [vmem:[%s5 + $0x48] sm:$0xff]
  %v113 = vld [vmem:[%s5 + $0x50] sm:$0xff]
  %v114 = vld [vmem:[%s5 + $0x58] sm:$0xff]
  %v115 = vld [vmem:[%s5 + $0x60] sm:$0xff]
  %v116 = vld [vmem:[%s5 + $0x68] sm:$0xff]
  %v117 = vld [vmem:[%s5 + $0x70] sm:$0xff]
  %v118 = vld [vmem:[%s5 + $0x78] sm:$0xff]
  %v119 = vld [vmem:[%s6] sm:$0x1]
  %v121 = vperm.slane %v119, 0
  %123 = vmatpush.msra.mxu0 %v118
  %124 = vmatpush.msra.mxu0 %v117
  %125 = vmatpush.msra.mxu0 %v116
  %126 = vmatpush.msra.mxu0 %v115
  %127 = vmatpush.msra.mxu0 %v114
  %128 = vmatpush.msra.mxu0 %v113
  %129 = vmatpush.msra.mxu0 %v112
  %130 = vmatpush.msra.mxu0 %v111
  %131 = vmatpush.msra.mxu0 %v110
  %132 = vmatpush.msra.mxu0 %v109
  %133 = vmatpush.msra.mxu0 %v108
  %134 = vmatpush.msra.mxu0 %v107
  %135 = vmatpush.msra.mxu0 %v106
  %136 = vmatpush.msra.mxu0 %v105
  %137 = vmatpush.msra.mxu0 %v104
  %138 = vmatpush.msra.mxu0 %v103
  %139 = vmatmul.f32.gmra.mxu0 %v102
  %v140 = vpop.f32.mrf.mxu0
  %v141 = vadd.f32 %v121, %v140
  %142 = vdwg.mxu0
  %v143 = vmul.f32 %v141, 1.442695
  %v144 = vpow.pop %v143
  %v145 = vmul.f32 %v144, %v144
  %v146 = vmul.f32 %v141, %v141
  %148 = vrot.lane.b32.xlu0 %v146, 16
  %v149 = vpop.permute.xlu0 %148
  %v151 = vadd.f32 %v145, %v149
  %v152 = vld [vmem:[%s7] sm:$0xff]
  %v153 = vld [vmem:[%s7 + $0x8] sm:$0xff]
  %155 = vrot.lane.b32.xlu0 %v151, 112
  %v156 = vpop.permute.xlu0 %155
  %vm157 = vcmask 130048
  %v158 = vsel %vm157, %v156, 0
  %160 = vmatpush.msra.mxu0 0.0
  %161 = vmatpush.msra.mxu0 0.0
  %162 = vmatpush.msra.mxu0 0.0
  %163 = vmatpush.msra.mxu0 0.0
  %164 = vmatpush.msra.mxu0 0.0
  %165 = vmatpush.msra.mxu0 0.0
  %166 = vmatpush.msra.mxu0 0.0
  %167 = vmatpush.msra.mxu0 0.0
  %168 = vmatpush.msra.mxu0 0.0
  %169 = vmatpush.msra.mxu0 0.0
  %170 = vmatpush.msra.mxu0 0.0
  %171 = vmatpush.msra.mxu0 0.0
  %172 = vmatpush.msra.mxu0 0.0
  %173 = vmatpush.msra.mxu0 0.0
  %174 = vmatpush.msra.mxu0 %v153
  %175 = vmatpush.msra.mxu0 %v152
  %176 = vmatmul.f32.gmra.mxu0 %v158
  %v177 = vpop.f32.mrf.mxu0
  %v178 = vadd.f32 0.0, %v177
  %179 = vdwg.mxu0
  %v180 = vmul.f32 %v178, 0.25
  %181 = vrot.lane.b32.xlu0 %v146, 96
  %v182 = vpop.permute.xlu0 %181
  %v184 = vsub.f32 %v180, %v182
  %v185 = vmax.f32 %v184, 0.0
  %187 = vrot.lane.b32.xlu0 %v141, 96
  %v188 = vpop.permute.xlu0 %187
  %vm190 = vcmask 31744
  %191 = vst.msk [vmem:[%s8] sm:$0xff] %vm190, %v188
  %v192 = vrsqrt.pop %v185
  %v193 = vmul.f32 %v192, %v185
  %v194 = vmul.f32 %v193, %v192
  %v195 = vmul.f32 0.5, %v194
  %v196 = vsub.f32 1.5, %v195
  %v197 = vmul.f32 %v192, %v196
  %v198 = vmul.f32 %v185, %v197
  %vm199 = vcmp.eq.f32.partialorder %v185, inf
  %v200 = vsel %vm199, %v185, %v198
  %vm201 = vcmp.eq.f32.partialorder %v185, 0.0
  %v202 = vand.u32 %v185, 2147483648
  %v203 = vsel %vm201, %v202, %v200
  %204 = vst.msk [vmem:[%s9] sm:$0xff] %vm190, %v203
  // Predicated region
  $region34: #{ensemble_forward.1} parent=0 // pred_check
    _
  $region35: #{ensemble_forward.1} parent=0 // pred_check_branch
    %206 = sbr.rel (0) target = $region37
  $region36: #{ensemble_forward.1} parent=0 // pred_region
    _
  $region37: #{ensemble_forward.1} parent=0 // pred_fallthru
    _
  // Predicated region
  $region38: #{ensemble_forward.1} parent=0 // pred_check
    _
  $region39: #{ensemble_forward.1} parent=0 // pred_check_branch
    %208 = sbr.rel (0) target = $region41
  $region40: #{ensemble_forward.1} parent=0 // pred_region
    _
  $region41: #{ensemble_forward.1} parent=0 // pred_fallthru
    _
  // Predicated region
  $region42: #{ensemble_forward.1} parent=0 // pred_check
    _
  $region43: #{ensemble_forward.1} parent=0 // pred_check_branch
    %210 = sbr.rel (0) target = $region45
  $region44: #{ensemble_forward.1} parent=0 // pred_region
    _
  $region45: #{ensemble_forward.1} parent=0 // pred_fallthru
    _
  // Predicated region
  $region46: #{ensemble_forward.1} parent=0 // pred_check
    _
  $region47: #{ensemble_forward.1} parent=0 // pred_check_branch
    %212 = sbr.rel (0) target = $region49
  $region48: #{ensemble_forward.1} parent=0 // pred_region
    _
  $region49: #{ensemble_forward.1} parent=0 // pred_fallthru
    _

</llo_original>
